<compile_context>
chip_gen: v6e
topology: v6e:2x2x1
jax: 0.10.0
libtpu: 0.0.40
codegen_flags: <defaults>
</compile_context>

<pallas_src>
import numpy as np
import jax
import jax.numpy as jnp
from jax.experimental import pallas as pl
from jax.experimental.pallas import tpu as pltpu  # noqa: F401  (TPU backend)

# torch: self.shift_direction = (random.random() > 0.5) * 2 - 1
# fixed deterministically here (synthetic module, no checkpoint).
SHIFT_DIRECTION = 1


def _build_tap_constants(shift):
    # M[m, j, m_src] = 1 iff stage-1 output row m uses tap j (valid, i.e. the
    # rolled row m+j-1 is in [0,7)), which reads *un-rolled* input row m_src.
    M = np.zeros((7, 3, 7), dtype=np.float32)
    for m in range(7):
        for j in range(3):
            mm = m + j - 1
            if 0 <= mm <= 6:
                M[m, j, (mm - shift) % 7] = 1.0
    # N[o_out, t, o_src] = 1 iff stage-2 output col o_out uses tap t reading col o_src.
    N = np.zeros((7, 3, 7), dtype=np.float32)
    for o in range(7):
        for t in range(3):
            oo = o + t - 1
            if 0 <= oo <= 6:
                N[o, t, oo] = 1.0
    return jnp.asarray(M), jnp.asarray(N)


def expand_weights(w1, w2, shift=SHIFT_DIRECTION):
    """One-time expansion of (w1, w2) into the block-Toeplitz matmul operands.

    Folds the roll and both unfold/pad (im2col) steps into the weights, so the
    runtime kernel is just two matmuls.  Call this ONCE (weights are static at
    inference); do not put it on the per-call path.
    """
    hi = jax.lax.Precision.HIGHEST
    M, N = _build_tap_constants(shift)
    # W1e[(k*7+m_out), (i*7+m_src)] : folds roll + H-pad taps.
    w1e = jnp.einsum('kij,mjx->kmix', w1, M, precision=hi).reshape(224, 448)
    # W2eT[(n*7+o_src), (i2*7+o_out)] : folds W-pad taps (already transposed).
    w2et = jnp.einsum('int,utx->nxiu', w2, N, precision=hi).reshape(112, 224)
    return w1e, w2et


def _fused_kernel(w1e_ref, x_ref, w2et_ref, out_ref):
    # Stage 1: contraction over (input channel i, source row m): (224,448)@(448,112)
    t4 = jnp.dot(w1e_ref[...], x_ref[...], preferred_element_type=jnp.float32)
    # Stage 2: contraction over (group n, source col o): (224,112)@(112,224)
    out_ref[...] = jnp.dot(t4, w2et_ref[...], preferred_element_type=jnp.float32)


_COST = pl.CostEstimate(
    flops=2 * (224 * 448 * 112 + 224 * 112 * 224),            # ~3.4e7
    transcendentals=0,
    bytes_accessed=4 * (224 * 448 + 448 * 112 + 112 * 224 + 224 * 224),  # ~0.9e6
)


def _forward_impl(x, w1e, w2et):
    # X2[(i*7 + m_src), (n*7 + o)] = x[i, n, m_src, o]  -- one small XLA transpose.
    x2 = jnp.transpose(x.reshape(64, 16, 7, 7), (0, 2, 1, 3)).reshape(448, 112)

    # Single fused kernel: no grid, full arrays resident in VMEM (defaults).
    out2 = pl.pallas_call(
        _fused_kernel,
        out_shape=jax.ShapeDtypeStruct((224, 224), jnp.float32),
        cost_estimate=_COST,
    )(w1e, x2, w2et)

    # out2[(k*7+m), (i2*7+o)] -> y[0, i2*32+k, m, o]  -- one small XLA transpose.
    return out2.reshape(32, 7, 32, 7).transpose(2, 0, 1, 3).reshape(1, 1024, 7, 7)


def make_forward(w1, w2, shift=SHIFT_DIRECTION):
    """Builds the per-call forward with the weight expansion hoisted out."""
    w1e, w2et = expand_weights(w1, w2, shift)   # computed once, not per call

    @jax.jit
    def forward(x):
        return _forward_impl(x, w1e, w2et)

    return forward


def kernel_generated_3_forward(x, w1, w2):
    """Drop-in full forward (re-expands weights each call); prefer make_forward()."""
    w1e, w2et = expand_weights(w1, w2)
    return _forward_impl(x, w1e, w2et)


def reference_forward(x, w1, w2):
    """Pure-JAX transcription of the PyTorch forward (for self-check)."""
    hi = jax.lax.Precision.HIGHEST
    t3 = x.reshape(1, 64, 16, 7, 7)
    t3 = jnp.roll(t3, SHIFT_DIRECTION, axis=3)
    t3 = t3.reshape(1, 1024, 7, 7)
    # F.unfold(t3, (3, 1), padding=(1, 0))
    t3p = jnp.pad(t3, ((0, 0), (0, 0), (1, 1), (0, 0)))
    patches = jnp.stack([t3p[:, :, j:j + 7, :] for j in range(3)], axis=2)
    t3u = patches.reshape(1, 64, 16, 3, 7, 7)
    t4 = jnp.einsum('linjmo,kij->lknmo', t3u, w1, precision=hi)
    t5 = t4.reshape(1, 3584, 7, 1)
    t5p = jnp.pad(t5, ((0, 0), (0, 0), (1, 1), (0, 0)))
    patches2 = jnp.stack([t5p[:, :, j:j + 7, :] for j in range(3)], axis=2)
    t5u = patches2.reshape(1, 32, 16, 7, 3, 7)
    t6 = jnp.einsum('lojmkn,ijk->liomn', t5u, w2, precision=hi)
    return t6.reshape(1, 1024, 7, 7)


if __name__ == "__main__":
    key = jax.random.PRNGKey(0)
    kx, k1, k2 = jax.random.split(key, 3)
    # The module's reshape to (1, 64, 16, 7, 7) pins the input size exactly.
    x = jax.random.normal(kx, (1, 1024, 7, 7), dtype=jnp.float32)
    w1 = jax.random.normal(k1, (32, 64, 3), dtype=jnp.float32)   # weights[0]
    w2 = jax.random.normal(k2, (32, 16, 3), dtype=jnp.float32)   # weights[1]

    # Weight expansion hoisted: done once here, outside the per-call path.
    fwd = make_forward(w1, w2)
    y = jax.block_until_ready(fwd(x))
    # Second call exercises the steady-state (no expansion, no retrace).
    y = jax.block_until_ready(fwd(x))

    y_ref = reference_forward(x, w1, w2)
    assert y.shape == (1, 1024, 7, 7)
    err = float(jnp.max(jnp.abs(y - y_ref)))
    assert jnp.allclose(y, y_ref, atol=1e-3, rtol=1e-3), err
    print("KERNEL_OK")
</pallas_src>

<mosaic_0001>
module attributes {stable_mosaic.version = 11 : i64} {
  func.func @_fused_kernel(%arg0: memref<224x448xf32, #tpu.memory_space<vmem>>, %arg1: memref<448x112xf32, #tpu.memory_space<vmem>>, %arg2: memref<112x224xf32, #tpu.memory_space<vmem>>, %arg3: memref<224x224xf32, #tpu.memory_space<vmem>>) attributes {dimension_semantics = [], scalar_prefetch = 0 : i64, scratch_operands = 0 : i64, tpu.core_type = #tpu.core_type<tc>} {
    %c0 = arith.constant 0 : index
    %c0_0 = arith.constant 0 : index
    %0 = vector.load %arg0[%c0, %c0_0] : memref<224x448xf32, #tpu.memory_space<vmem>>, vector<224x448xf32>
    %c0_1 = arith.constant 0 : index
    %c0_2 = arith.constant 0 : index
    %1 = vector.load %arg1[%c0_1, %c0_2] : memref<448x112xf32, #tpu.memory_space<vmem>>, vector<448x112xf32>
    %cst = arith.constant dense<0.000000e+00> : vector<224x112xf32>
    %2 = tpu.matmul %0, %1, %cst {dimension_numbers = #tpu.dot_dimension_numbers<[1], [0], [0], [1], [0, 0, 1, 1], [], []>} : vector<224x448xf32>, vector<448x112xf32>, vector<224x112xf32> -> vector<224x112xf32>
    %c0_3 = arith.constant 0 : index
    %c0_4 = arith.constant 0 : index
    %3 = vector.load %arg2[%c0_3, %c0_4] : memref<112x224xf32, #tpu.memory_space<vmem>>, vector<112x224xf32>
    %cst_5 = arith.constant dense<0.000000e+00> : vector<224x224xf32>
    %4 = tpu.matmul %2, %3, %cst_5 {dimension_numbers = #tpu.dot_dimension_numbers<[1], [0], [0], [1], [0, 0, 1, 1], [], []>} : vector<224x112xf32>, vector<112x224xf32>, vector<224x224xf32> -> vector<224x224xf32>
    %c0_6 = arith.constant 0 : index
    %c0_7 = arith.constant 0 : index
    %5 = vector.load %arg3[%c0_6, %c0_7] : memref<224x224xf32, #tpu.memory_space<vmem>>, vector<224x224xf32>
    tpu.vector_store %arg3[%c0_6, %c0_7], %4 {strides = array<i32>} : memref<224x224xf32, #tpu.memory_space<vmem>>, vector<224x224xf32>,
    return
  }
}

</mosaic_0001>

<llo_original>
// kernel: forward.1
$region0: #{forward.1}
  #allocation0 [shape = 'u32[]', space=smem, size = 0x4, offset = 0x4, fixed_abs, tag = 'smem constant byte address 0x4 - core index']
  #allocation1 [shape = 'u32[144,128]{1,0:T(1,128)}', space=vmem, size = 0x12000, scoped, tag = 'internal scratch']
  %s0 = inlined_call_operand.vmem [shape: f32[224,448], index: 0, kind: input, shape index: {}]
  %s1 = inlined_call_operand.vmem [shape: f32[448,112], index: 1, kind: input, shape index: {}]
  %s2 = inlined_call_operand.vmem [shape: f32[112,224], index: 2, kind: input, shape index: {}]
  %s3 = inlined_call_operand.vmem [shape: f32[224,224], index: 3, kind: output, shape index: {}]
  %s4 = sld [smem:[#allocation0]]
  $region22: #{forward.1} parent=0
    _
  %s6 = ssub.s32 1, %s4
  %s7 = scalar_select 0, %s6, %s4
  // Predicated region
  $region2: #{forward.1} parent=0 // pred_check
    _
  $region3: #{forward.1} parent=0 // pred_check_branch
    %9 = sbr.rel (0) target = $region5
  $region4: #{forward.1} parent=0 // pred_region
    _
  $region5: #{forward.1} parent=0 // pred_fallthru
    _
  // Predicated region
  $region6: #{forward.1} parent=0 // pred_check
    _
  $region7: #{forward.1} parent=0 // pred_check_branch
    %11 = sbr.rel (0) target = $region9
  $region8: #{forward.1} parent=0 // pred_region
    _
  $region9: #{forward.1} parent=0 // pred_fallthru
    _
  // Predicated region
  $region10: #{forward.1} parent=0 // pred_check
    _
  $region11: #{forward.1} parent=0 // pred_check_branch
    %13 = sbr.rel (0) target = $region13
  $region12: #{forward.1} parent=0 // pred_region
    _
  $region13: #{forward.1} parent=0 // pred_fallthru
    _
  %v14 = vld [vmem:[%s0] sm:$0xff]
  %v15 = vld [vmem:[%s0 + $0x8] sm:$0xff]
  %v16 = vld [vmem:[%s0 + $0x10] sm:$0xff]
  %v17 = vld [vmem:[%s0 + $0x18] sm:$0xff]
  %v18 = vld [vmem:[%s0 + $0x20] sm:$0xff]
  %v19 = vld [vmem:[%s0 + $0x28] sm:$0xff]
  %v20 = vld [vmem:[%s0 + $0x30] sm:$0xff]
  %v21 = vld [vmem:[%s0 + $0x38] sm:$0xff]
  %v22 = vld [vmem:[%s0 + $0x40] sm:$0xff]
  %v23 = vld [vmem:[%s0 + $0x48] sm:$0xff]
  %v24 = vld [vmem:[%s0 + $0x50] sm:$0xff]
  %v25 = vld [vmem:[%s0 + $0x58] sm:$0xff]
  %v26 = vld [vmem:[%s0 + $0x60] sm:$0xff]
  %v27 = vld [vmem:[%s0 + $0x68] sm:$0xff]
  %v28 = vld [vmem:[%s0 + $0x70] sm:$0xff]
  %v29 = vld [vmem:[%s0 + $0x78] sm:$0xff]
  %v30 = vld [vmem:[%s0 + $0x80] sm:$0xff]
  %v31 = vld [vmem:[%s0 + $0x88] sm:$0xff]
  %v32 = vld [vmem:[%s0 + $0x90] sm:$0xff]
  %v33 = vld [vmem:[%s0 + $0x98] sm:$0xff]
  %v34 = vld [vmem:[%s0 + $0xa0] sm:$0xff]
  %v35 = vld [vmem:[%s0 + $0xa8] sm:$0xff]
  %v36 = vld [vmem:[%s0 + $0xb0] sm:$0xff]
  %v37 = vld [vmem:[%s0 + $0xb8] sm:$0xff]
  %v38 = vld [vmem:[%s0 + $0xc0] sm:$0xff]
  %v39 = vld [vmem:[%s0 + $0xc8] sm:$0xff]
  %v40 = vld [vmem:[%s0 + $0xd0] sm:$0xff]
  %v41 = vld [vmem:[%s0 + $0xd8] sm:$0xff]
  %v42 = vld [vmem:[%s0 + $0xe0] sm:$0xff]
  %v43 = vld [vmem:[%s0 + $0xe8] sm:$0xff]
  %v44 = vld [vmem:[%s0 + $0xf0] sm:$0xff]
  %v45 = vld [vmem:[%s0 + $0xf8] sm:$0xff]
  %v46 = vld [vmem:[%s0 + $0x100] sm:$0xff]
  %v47 = vld [vmem:[%s0 + $0x108] sm:$0xff]
  %v48 = vld [vmem:[%s0 + $0x110] sm:$0xff]
  %v49 = vld [vmem:[%s0 + $0x118] sm:$0xff]
  %v50 = vld [vmem:[%s0 + $0x120] sm:$0xff]
  %v51 = vld [vmem:[%s0 + $0x128] sm:$0xff]
  %v52 = vld [vmem:[%s0 + $0x130] sm:$0xff]
  %v53 = vld [vmem:[%s0 + $0x138] sm:$0xff]
  %v54 = vld [vmem:[%s0 + $0x140] sm:$0xff]
  %v55 = vld [vmem:[%s0 + $0x148] sm:$0xff]
  %v56 = vld [vmem:[%s0 + $0x150] sm:$0xff]
  %v57 = vld [vmem:[%s0 + $0x158] sm:$0xff]
  %v58 = vld [vmem:[%s0 + $0x160] sm:$0xff]
  %v59 = vld [vmem:[%s0 + $0x168] sm:$0xff]
  %v60 = vld [vmem:[%s0 + $0x170] sm:$0xff]
  %v61 = vld [vmem:[%s0 + $0x178] sm:$0xff]
  %v62 = vld [vmem:[%s0 + $0x180] sm:$0xff]
  %v63 = vld [vmem:[%s0 + $0x188] sm:$0xff]
  %v64 = vld [vmem:[%s0 + $0x190] sm:$0xff]
  %v65 = vld [vmem:[%s0 + $0x198] sm:$0xff]
  %v66 = vld [vmem:[%s0 + $0x1a0] sm:$0xff]
  %v67 = vld [vmem:[%s0 + $0x1a8] sm:$0xff]
  %v68 = vld [vmem:[%s0 + $0x1b0] sm:$0xff]
  %v69 = vld [vmem:[%s0 + $0x1b8] sm:$0xff]
  %v70 = vld [vmem:[%s0 + $0x1c0] sm:$0xff]
  %v71 = vld [vmem:[%s0 + $0x1c8] sm:$0xff]
  %v72 = vld [vmem:[%s0 + $0x1d0] sm:$0xff]
  %v73 = vld [vmem:[%s0 + $0x1d8] sm:$0xff]
  %v74 = vld [vmem:[%s0 + $0x1e0] sm:$0xff]
  %v75 = vld [vmem:[%s0 + $0x1e8] sm:$0xff]
  %v76 = vld [vmem:[%s0 + $0x1f0] sm:$0xff]
  %v77 = vld [vmem:[%s0 + $0x1f8] sm:$0xff]
  %v78 = vld [vmem:[%s0 + $0x200] sm:$0xff]
  %v79 = vld [vmem:[%s0 + $0x208] sm:$0xff]
  %v80 = vld [vmem:[%s0 + $0x210] sm:$0xff]
  %v81 = vld [vmem:[%s0 + $0x218] sm:$0xff]
  %v82 = vld [vmem:[%s0 + $0x220] sm:$0xff]
  %v83 = vld [vmem:[%s0 + $0x228] sm:$0xff]
  %v84 = vld [vmem:[%s0 + $0x230] sm:$0xff]
  %v85 = vld [vmem:[%s0 + $0x238] sm:$0xff]
  %v86 = vld [vmem:[%s0 + $0x240] sm:$0xff]
  %v87 = vld [vmem:[%s0 + $0x248] sm:$0xff]
  %v88 = vld [vmem:[%s0 + $0x250] sm:$0xff]
  %v89 = vld [vmem:[%s0 + $0x258] sm:$0xff]
  %v90 = vld [vmem:[%s0 + $0x260] sm:$0xff]
  %v91 = vld [vmem:[%s0 + $0x268] sm:$0xff]
  %v92 = vld [vmem:[%s0 + $0x270] sm:$0xff]
  %v93 = vld [vmem:[%s0 + $0x278] sm:$0xff]
  %v94 = vld [vmem:[%s0 + $0x280] sm:$0xff]
  %v95 = vld [vmem:[%s0 + $0x288] sm:$0xff]
  %v96 = vld [vmem:[%s0 + $0x290] sm:$0xff]
  %v97 = vld [vmem:[%s0 + $0x298] sm:$0xff]
  %v98 = vld [vmem:[%s0 + $0x2a0] sm:$0xff]
  %v99 = vld [vmem:[%s0 + $0x2a8] sm:$0xff]
  %v100 = vld [vmem:[%s0 + $0x2b0] sm:$0xff]
  %v101 = vld [vmem:[%s0 + $0x2b8] sm:$0xff]
  %v102 = vld [vmem:[%s0 + $0x2c0] sm:$0xff]
  %v103 = vld [vmem:[%s0 + $0x2c8] sm:$0xff]
  %v104 = vld [vmem:[%s0 + $0x2d0] sm:$0xff]
  %v105 = vld [vmem:[%s0 + $0x2d8] sm:$0xff]
  %v106 = vld [vmem:[%s0 + $0x2e0] sm:$0xff]
  %v107 = vld [vmem:[%s0 + $0x2e8] sm:$0xff]
  %v108 = vld [vmem:[%s0 + $0x2f0] sm:$0xff]
  %v109 = vld [vmem:[%s0 + $0x2f8] sm:$0xff]
  %v110 = vld [vmem:[%s0 + $0x300] sm:$0xff]
  %v111 = vld [vmem:[%s0 + $0x308] sm:$0xff]
  %v112 = vld [vmem:[%s0 + $0x310] sm:$0xff]
  %v113 = vld [vmem:[%s0 + $0x318] sm:$0xff]
  %v114 = vld [vmem:[%s0 + $0x320] sm:$0xff]
  %v115 = vld [vmem:[%s0 + $0x328] sm:$0xff]
  %v116 = vld [vmem:[%s0 + $0x330] sm:$0xff]
  %v117 = vld [vmem:[%s0 + $0x338] sm:$0xff]
  %v118 = vld [vmem:[%s0 + $0x340] sm:$0xff]
  %v119 = vld [vmem:[%s0 + $0x348] sm:$0xff]
  %v120 = vld [vmem:[%s0 + $0x350] sm:$0xff]
  %v121 = vld [vmem:[%s0 + $0x358] sm:$0xff]
  %v122 = vld [vmem:[%s0 + $0x360] sm:$0xff]
  %v123 = vld [vmem:[%s0 + $0x368] sm:$0xff]
  %v124 = vld [vmem:[%s0 + $0x370] sm:$0xff]
  %v125 = vld [vmem:[%s0 + $0x378] sm:$0xff]
  %v126 = vld [vmem:[%s1] sm:$0xff]
  %v127 = vld [vmem:[%s1 + $0x8] sm:$0xff]
  %v128 = vld [vmem:[%s1 + $0x10] sm:$0xff]
  %v129 = vld [vmem:[%s1 + $0x18] sm:$0xff]
  %v130 = vld [vmem:[%s1 + $0x20] sm:$0xff]
  %v131 = vld [vmem:[%s1 + $0x28] sm:$0xff]
  %v132 = vld [vmem:[%s1 + $0x30] sm:$0xff]
  %v133 = vld [vmem:[%s1 + $0x38] sm:$0xff]
  %v134 = vld [vmem:[%s1 + $0x40] sm:$0xff]
  %v135 = vld [vmem:[%s1 + $0x48] sm:$0xff]
  %v136 = vld [vmem:[%s1 + $0x50] sm:$0xff]
  %v137 = vld [vmem:[%s1 + $0x58] sm:$0xff]
  %v138 = vld [vmem:[%s1 + $0x60] sm:$0xff]
  %v139 = vld [vmem:[%s1 + $0x68] sm:$0xff]
  %v140 = vld [vmem:[%s1 + $0x70] sm:$0xff]
  %v141 = vld [vmem:[%s1 + $0x78] sm:$0xff]
  %v142 = vld [vmem:[%s1 + $0x80] sm:$0xff]
  %v143 = vld [vmem:[%s1 + $0x88] sm:$0xff]
  %v144 = vld [vmem:[%s1 + $0x90] sm:$0xff]
  %v145 = vld [vmem:[%s1 + $0x98] sm:$0xff]
  %v146 = vld [vmem:[%s1 + $0xa0] sm:$0xff]
  %v147 = vld [vmem:[%s1 + $0xa8] sm:$0xff]
  %v148 = vld [vmem:[%s1 + $0xb0] sm:$0xff]
  %v149 = vld [vmem:[%s1 + $0xb8] sm:$0xff]
  %v150 = vld [vmem:[%s1 + $0xc0] sm:$0xff]
  %v151 = vld [vmem:[%s1 + $0xc8] sm:$0xff]
  %v152 = vld [vmem:[%s1 + $0xd0] sm:$0xff]
  %v153 = vld [vmem:[%s1 + $0xd8] sm:$0xff]
  %v154 = vld [vmem:[%s1 + $0xe0] sm:$0xff]
  %v155 = vld [vmem:[%s1 + $0xe8] sm:$0xff]
  %v156 = vld [vmem:[%s1 + $0xf0] sm:$0xff]
  %v157 = vld [vmem:[%s1 + $0xf8] sm:$0xff]
  %v158 = vld [vmem:[%s1 + $0x100] sm:$0xff]
  %v159 = vld [vmem:[%s1 + $0x108] sm:$0xff]
  %v160 = vld [vmem:[%s1 + $0x110] sm:$0xff]
  %v161 = vld [vmem:[%s1 + $0x118] sm:$0xff]
  %v162 = vld [vmem:[%s1 + $0x120] sm:$0xff]
  %v163 = vld [vmem:[%s1 + $0x128] sm:$0xff]
  %v164 = vld [vmem:[%s1 + $0x130] sm:$0xff]
  %v165 = vld [vmem:[%s1 + $0x138] sm:$0xff]
  %v166 = vld [vmem:[%s1 + $0x140] sm:$0xff]
  %v167 = vld [vmem:[%s1 + $0x148] sm:$0xff]
  %v168 = vld [vmem:[%s1 + $0x150] sm:$0xff]
  %v169 = vld [vmem:[%s1 + $0x158] sm:$0xff]
  %v170 = vld [vmem:[%s1 + $0x160] sm:$0xff]
  %v171 = vld [vmem:[%s1 + $0x168] sm:$0xff]
  %v172 = vld [vmem:[%s1 + $0x170] sm:$0xff]
  %v173 = vld [vmem:[%s1 + $0x178] sm:$0xff]
  %v174 = vld [vmem:[%s1 + $0x180] sm:$0xff]
  %v175 = vld [vmem:[%s1 + $0x188] sm:$0xff]
  %v176 = vld [vmem:[%s1 + $0x190] sm:$0xff]
  %v177 = vld [vmem:[%s1 + $0x198] sm:$0xff]
  %v178 = vld [vmem:[%s1 + $0x1a0] sm:$0xff]
  %v179 = vld [vmem:[%s1 + $0x1a8] sm:$0xff]
  %v180 = vld [vmem:[%s1 + $0x1b0] sm:$0xff]
  %v181 = vld [vmem:[%s1 + $0x1b8] sm:$0xff]
  %vm182 = vcmask 523264
  %v184 = vsel %vm182, %v17, 0
  %v187 = vsel %vm182, %v21, 0
  %v190 = vsel %vm182, %v25, 0
  %v193 = vsel %vm182, %v29, 0
  %v196 = vsel %vm182, %v33, 0
  %v199 = vsel %vm182, %v37, 0
  %v202 = vsel %vm182, %v41, 0
  %v205 = vsel %vm182, %v45, 0
  %v208 = vsel %vm182, %v49, 0
  %v211 = vsel %vm182, %v53, 0
  %v214 = vsel %vm182, %v57, 0
  %v217 = vsel %vm182, %v61, 0
  %v220 = vsel %vm182, %v65, 0
  %v223 = vsel %vm182, %v69, 0
  %v226 = vsel %vm182, %v73, 0
  %v229 = vsel %vm182, %v77, 0
  %v232 = vsel %vm182, %v81, 0
  %v235 = vsel %vm182, %v85, 0
  %v238 = vsel %vm182, %v89, 0
  %v241 = vsel %vm182, %v93, 0
  %v244 = vsel %vm182, %v97, 0
  %v247 = vsel %vm182, %v101, 0
  %v250 = vsel %vm182, %v105, 0
  %v253 = vsel %vm182, %v109, 0
  %v256 = vsel %vm182, %v113, 0
  %v259 = vsel %vm182, %v117, 0
  %v262 = vsel %vm182, %v121, 0
  %v265 = vsel %vm182, %v125, 0
  %267 = vmatprep.subr.mxu0 0.0
  %268 = vmatpush1.msra.mxu0 %v141
  %269 = vmatprep.subr.mxu0 0.0
  %270 = vmatpush1.msra.mxu0 %v140
  %271 = vmatprep.subr.mxu0 0.0
  %272 = vmatpush1.msra.mxu0 %v139
  %273 = vmatprep.subr.mxu0 0.0
  %274 = vmatpush1.msra.mxu0 %v138
  %275 = vmatprep.subr.mxu0 0.0
  %276 = vmatpush1.msra.mxu0 %v137
  %277 = vmatprep.subr.mxu0 0.0
  %278 = vmatpush1.msra.mxu0 %v136
  %279 = vmatprep.subr.mxu0 0.0
  %280 = vmatpush1.msra.mxu0 %v135
  %281 = vmatprep.subr.mxu0 0.0
  %282 = vmatpush1.msra.mxu0 %v134
  %283 = vmatprep.subr.mxu0 0.0
  %284 = vmatpush1.msra.mxu0 %v133
  %285 = vmatprep.subr.mxu0 0.0
  %286 = vmatpush1.msra.mxu0 %v132
  %287 = vmatprep.subr.mxu0 0.0
  %288 = vmatpush1.msra.mxu0 %v131
  %289 = vmatprep.subr.mxu0 0.0
  %290 = vmatpush1.msra.mxu0 %v130
  %291 = vmatprep.subr.mxu0 0.0
  %292 = vmatpush1.msra.mxu0 %v129
  %293 = vmatprep.subr.mxu0 0.0
  %294 = vmatpush1.msra.mxu0 %v128
  %295 = vmatprep.subr.mxu0 0.0
  %296 = vmatpush1.msra.mxu0 %v127
  %297 = vmatprep.subr.mxu0 0.0
  %298 = vmatpush1.msra.mxu0 %v126
  %299 = vmatprep.subr.mxu0 0.0
  %300 = vmatpush2.msra.mxu0 %v157
  %301 = vmatprep.subr.mxu0 0.0
  %302 = vmatpush2.msra.mxu0 %v156
  %303 = vmatprep.subr.mxu0 0.0
  %304 = vmatpush2.msra.mxu0 %v155
  %305 = vmatprep.subr.mxu0 0.0
  %306 = vmatpush2.msra.mxu0 %v154
  %307 = vmatprep.subr.mxu0 0.0
  %308 = vmatpush2.msra.mxu0 %v153
  %309 = vmatprep.subr.mxu0 0.0
  %310 = vmatpush2.msra.mxu0 %v152
  %311 = vmatprep.subr.mxu0 0.0
  %312 = vmatpush2.msra.mxu0 %v151
  %313 = vmatprep.subr.mxu0 0.0
  %314 = vmatpush2.msra.mxu0 %v150
  %315 = vmatprep.subr.mxu0 0.0
  %316 = vmatpush2.msra.mxu0 %v149
  %317 = vmatprep.subr.mxu0 0.0
  %318 = vmatpush2.msra.mxu0 %v148
  %319 = vmatprep.subr.mxu0 0.0
  %320 = vmatpush2.msra.mxu0 %v147
  %321 = vmatprep.subr.mxu0 0.0
  %322 = vmatpush2.msra.mxu0 %v146
  %323 = vmatprep.subr.mxu0 0.0
  %324 = vmatpush2.msra.mxu0 %v145
  %325 = vmatprep.subr.mxu0 0.0
  %326 = vmatpush2.msra.mxu0 %v144
  %327 = vmatprep.subr.mxu0 0.0
  %328 = vmatpush2.msra.mxu0 %v143
  %329 = vmatprep.subr.mxu0 0.0
  %330 = vmatpush2.msra.mxu0 %v142
  %331 = vmatprep.mubr.f32.mxu0 %v15
  %332 = vmatmul.mubr.f32.gmra.mxu0 %v14
  %v333 = vpop.f32.mrf.mxu0
  %v334 = vadd.f32 0.0, %v333
  %v335 = vpop.f32.mrf.mxu0
  %336 = vmatprep.mubr.f32.mxu0 %v19
  %337 = vmatmul.mubr.f32.gmra.mxu0 %v18
  %v338 = vpop.f32.mrf.mxu0
  %v339 = vadd.f32 0.0, %v338
  %v340 = vpop.f32.mrf.mxu0
  %341 = vmatprep.mubr.f32.mxu0 %v23
  %342 = vmatmul.mubr.f32.gmra.mxu0 %v22
  %v343 = vpop.f32.mrf.mxu0
  %v344 = vadd.f32 0.0, %v343
  %v345 = vpop.f32.mrf.mxu0
  %346 = vmatprep.mubr.f32.mxu0 %v27
  %347 = vmatmul.mubr.f32.gmra.mxu0 %v26
  %v348 = vpop.f32.mrf.mxu0
  %v349 = vadd.f32 0.0, %v348
  %v350 = vpop.f32.mrf.mxu0
  %351 = vmatprep.mubr.f32.mxu0 %v31
  %352 = vmatmul.mubr.f32.gmra.mxu0 %v30
  %v353 = vpop.f32.mrf.mxu0
  %v354 = vadd.f32 0.0, %v353
  %v355 = vpop.f32.mrf.mxu0
  %356 = vmatprep.mubr.f32.mxu0 %v35
  %357 = vmatmul.mubr.f32.gmra.mxu0 %v34
  %v358 = vpop.f32.mrf.mxu0
  %v359 = vadd.f32 0.0, %v358
  %v360 = vpop.f32.mrf.mxu0
  %361 = vmatprep.mubr.f32.mxu0 %v39
  %362 = vmatmul.mubr.f32.gmra.mxu0 %v38
  %v363 = vpop.f32.mrf.mxu0
  %v364 = vadd.f32 0.0, %v363
  %v365 = vpop.f32.mrf.mxu0
  %366 = vmatprep.mubr.f32.mxu0 %v43
  %367 = vmatmul.mubr.f32.gmra.mxu0 %v42
  %v368 = vpop.f32.mrf.mxu0
  %v369 = vadd.f32 0.0, %v368
  %v370 = vpop.f32.mrf.mxu0
  %371 = vmatprep.mubr.f32.mxu0 %v47
  %372 = vmatmul.mubr.f32.gmra.mxu0 %v46
  %v373 = vpop.f32.mrf.mxu0
  %v374 = vadd.f32 0.0, %v373
  %v375 = vpop.f32.mrf.mxu0
  %376 = vmatprep.mubr.f32.mxu0 %v51
  %377 = vmatmul.mubr.f32.gmra.mxu0 %v50
  %v378 = vpop.f32.mrf.mxu0
  %v379 = vadd.f32 0.0, %v378
  %v380 = vpop.f32.mrf.mxu0
  %381 = vmatprep.mubr.f32.mxu0 %v55
  %382 = vmatmul.mubr.f32.gmra.mxu0 %v54
  %v383 = vpop.f32.mrf.mxu0
  %v384 = vadd.f32 0.0, %v383
  %v385 = vpop.f32.mrf.mxu0
  %386 = vmatprep.mubr.f32.mxu0 %v59
  %387 = vmatmul.mubr.f32.gmra.mxu0 %v58
  %v388 = vpop.f32.mrf.mxu0
  %v389 = vadd.f32 0.0, %v388
  %v390 = vpop.f32.mrf.mxu0
  %391 = vmatprep.mubr.f32.mxu0 %v63
  %392 = vmatmul.mubr.f32.gmra.mxu0 %v62
  %v393 = vpop.f32.mrf.mxu0
  %v394 = vadd.f32 0.0, %v393
  %v395 = vpop.f32.mrf.mxu0
  %396 = vmatprep.mubr.f32.mxu0 %v67
  %397 = vmatmul.mubr.f32.gmra.mxu0 %v66
  %v398 = vpop.f32.mrf.mxu0
  %v399 = vadd.f32 0.0, %v398
  %v400 = vpop.f32.mrf.mxu0
  %401 = vmatprep.mubr.f32.mxu0 %v71
  %402 = vmatmul.mubr.f32.gmra.mxu0 %v70
  %v403 = vpop.f32.mrf.mxu0
  %v404 = vadd.f32 0.0, %v403
  %v405 = vpop.f32.mrf.mxu0
  %406 = vmatprep.mubr.f32.mxu0 %v75
  %407 = vmatmul.mubr.f32.gmra.mxu0 %v74
  %v408 = vpop.f32.mrf.mxu0
  %v409 = vadd.f32 0.0, %v408
  %v410 = vpop.f32.mrf.mxu0
  %411 = vmatprep.mubr.f32.mxu0 %v79
  %412 = vmatmul.mubr.f32.gmra.mxu0 %v78
  %v413 = vpop.f32.mrf.mxu0
  %v414 = vadd.f32 0.0, %v413
  %v415 = vpop.f32.mrf.mxu0
  %416 = vmatprep.mubr.f32.mxu0 %v83
  %417 = vmatmul.mubr.f32.gmra.mxu0 %v82
  %v418 = vpop.f32.mrf.mxu0
  %v419 = vadd.f32 0.0, %v418
  %v420 = vpop.f32.mrf.mxu0
  %421 = vmatprep.mubr.f32.mxu0 %v87
  %422 = vmatmul.mubr.f32.gmra.mxu0 %v86
  %v423 = vpop.f32.mrf.mxu0
  %v424 = vadd.f32 0.0, %v423
  %v425 = vpop.f32.mrf.mxu0
  %426 = vmatprep.mubr.f32.mxu0 %v91
  %427 = vmatmul.mubr.f32.gmra.mxu0 %v90
  %v428 = vpop.f32.mrf.mxu0
  %v429 = vadd.f32 0.0, %v428
  %v430 = vpop.f32.mrf.mxu0
  %431 = vmatprep.mubr.f32.mxu0 %v95
  %432 = vmatmul.mubr.f32.gmra.mxu0 %v94
  %v433 = vpop.f32.mrf.mxu0
  %v434 = vadd.f32 0.0, %v433
  %v435 = vpop.f32.mrf.mxu0
  %436 = vmatprep.mubr.f32.mxu0 %v99
  %437 = vmatmul.mubr.f32.gmra.mxu0 %v98
  %v438 = vpop.f32.mrf.mxu0
  %v439 = vadd.f32 0.0, %v438
  %v440 = vpop.f32.mrf.mxu0
  %441 = vmatprep.mubr.f32.mxu0 %v103
  %442 = vmatmul.mubr.f32.gmra.mxu0 %v102
  %v443 = vpop.f32.mrf.mxu0
  %v444 = vadd.f32 0.0, %v443
  %v445 = vpop.f32.mrf.mxu0
  %446 = vmatprep.mubr.f32.mxu0 %v107
  %447 = vmatmul.mubr.f32.gmra.mxu0 %v106
  %v448 = vpop.f32.mrf.mxu0
  %v449 = vadd.f32 0.0, %v448
  %v450 = vpop.f32.mrf.mxu0
  %451 = vmatprep.mubr.f32.mxu0 %v111
  %452 = vmatmul.mubr.f32.gmra.mxu0 %v110
  %v453 = vpop.f32.mrf.mxu0
  %v454 = vadd.f32 0.0, %v453
  %v455 = vpop.f32.mrf.mxu0
  %456 = vmatprep.mubr.f32.mxu0 %v115
  %457 = vmatmul.mubr.f32.gmra.mxu0 %v114
  %v458 = vpop.f32.mrf.mxu0
  %v459 = vadd.f32 0.0, %v458
  %v460 = vpop.f32.mrf.mxu0
  %461 = vmatprep.mubr.f32.mxu0 %v119
  %462 = vmatmul.mubr.f32.gmra.mxu0 %v118
  %v463 = vpop.f32.mrf.mxu0
  %v464 = vadd.f32 0.0, %v463
  %v465 = vpop.f32.mrf.mxu0
  %466 = vmatprep.mubr.f32.mxu0 %v123
  %467 = vmatmul.mubr.f32.gmra.mxu0 %v122
  %v468 = vpop.f32.mrf.mxu0
  %v469 = vadd.f32 0.0, %v468
  %v470 = vpop.f32.mrf.mxu0
  %471 = vdwg.mxu0
  %472 = vmatprep.subr.mxu0 0.0
  %473 = vmatpush1.msra.mxu0 %v173
  %474 = vmatprep.subr.mxu0 0.0
  %475 = vmatpush1.msra.mxu0 %v172
  %476 = vmatprep.subr.mxu0 0.0
  %477 = vmatpush1.msra.mxu0 %v171
  %478 = vmatprep.subr.mxu0 0.0
  %479 = vmatpush1.msra.mxu0 %v170
  %480 = vmatprep.subr.mxu0 0.0
  %481 = vmatpush1.msra.mxu0 %v169
  %482 = vmatprep.subr.mxu0 0.0
  %483 = vmatpush1.msra.mxu0 %v168
  %484 = vmatprep.subr.mxu0 0.0
  %485 = vmatpush1.msra.mxu0 %v167
  %486 = vmatprep.subr.mxu0 0.0
  %487 = vmatpush1.msra.mxu0 %v166
  %488 = vmatprep.subr.mxu0 0.0
  %489 = vmatpush1.msra.mxu0 %v165
  %490 = vmatprep.subr.mxu0 0.0
  %491 = vmatpush1.msra.mxu0 %v164
  %492 = vmatprep.subr.mxu0 0.0
  %493 = vmatpush1.msra.mxu0 %v163
  %494 = vmatprep.subr.mxu0 0.0
  %495 = vmatpush1.msra.mxu0 %v162
  %496 = vmatprep.subr.mxu0 0.0
  %497 = vmatpush1.msra.mxu0 %v161
  %498 = vmatprep.subr.mxu0 0.0
  %499 = vmatpush1.msra.mxu0 %v160
  %500 = vmatprep.subr.mxu0 0.0
  %501 = vmatpush1.msra.mxu0 %v159
  %502 = vmatprep.subr.mxu0 0.0
  %503 = vmatpush1.msra.mxu0 %v158
  %504 = vmatprep.subr.mxu0 0.0
  %505 = vmatpush2.msra.mxu0 0.0
  %506 = vmatprep.subr.mxu0 0.0
  %507 = vmatpush2.msra.mxu0 0.0
  %508 = vmatprep.subr.mxu0 0.0
  %509 = vmatpush2.msra.mxu0 0.0
  %510 = vmatprep.subr.mxu0 0.0
  %511 = vmatpush2.msra.mxu0 0.0
  %512 = vmatprep.subr.mxu0 0.0
  %513 = vmatpush2.msra.mxu0 0.0
  %514 = vmatprep.subr.mxu0 0.0
  %515 = vmatpush2.msra.mxu0 0.0
  %516 = vmatprep.subr.mxu0 0.0
  %517 = vmatpush2.msra.mxu0 0.0
  %518 = vmatprep.subr.mxu0 0.0
  %519 = vmatpush2.msra.mxu0 0.0
  %520 = vmatprep.subr.mxu0 0.0
  %521 = vmatpush2.msra.mxu0 %v181
  %522 = vmatprep.subr.mxu0 0.0
  %523 = vmatpush2.msra.mxu0 %v180
  %524 = vmatprep.subr.mxu0 0.0
  %525 = vmatpush2.msra.mxu0 %v179
  %526 = vmatprep.subr.mxu0 0.0
  %527 = vmatpush2.msra.mxu0 %v178
  %528 = vmatprep.subr.mxu0 0.0
  %529 = vmatpush2.msra.mxu0 %v177
  %530 = vmatprep.subr.mxu0 0.0
  %531 = vmatpush2.msra.mxu0 %v176
  %532 = vmatprep.subr.mxu0 0.0
  %533 = vmatpush2.msra.mxu0 %v175
  %534 = vmatprep.subr.mxu0 0.0
  %535 = vmatpush2.msra.mxu0 %v174
  %536 = vmatprep.mubr.f32.mxu0 %v184
  %537 = vmatmul.mubr.f32.gmra.mxu0 %v16
  %v538 = vpop.f32.mrf.mxu0
  %v539 = vadd.f32 %v334, %v538
  %v540 = vpop.f32.mrf.mxu0
  %541 = vmatprep.mubr.f32.mxu0 %v187
  %542 = vmatmul.mubr.f32.gmra.mxu0 %v20
  %v543 = vpop.f32.mrf.mxu0
  %v544 = vadd.f32 %v339, %v543
  %v545 = vpop.f32.mrf.mxu0
  %546 = vmatprep.mubr.f32.mxu0 %v190
  %547 = vmatmul.mubr.f32.gmra.mxu0 %v24
  %v548 = vpop.f32.mrf.mxu0
  %v549 = vadd.f32 %v344, %v548
  %v550 = vpop.f32.mrf.mxu0
  %551 = vmatprep.mubr.f32.mxu0 %v193
  %552 = vmatmul.mubr.f32.gmra.mxu0 %v28
  %v553 = vpop.f32.mrf.mxu0
  %v554 = vadd.f32 %v349, %v553
  %v555 = vpop.f32.mrf.mxu0
  %556 = vmatprep.mubr.f32.mxu0 %v196
  %557 = vmatmul.mubr.f32.gmra.mxu0 %v32
  %v558 = vpop.f32.mrf.mxu0
  %v559 = vadd.f32 %v354, %v558
  %v560 = vpop.f32.mrf.mxu0
  %561 = vmatprep.mubr.f32.mxu0 %v199
  %562 = vmatmul.mubr.f32.gmra.mxu0 %v36
  %v563 = vpop.f32.mrf.mxu0
  %v564 = vadd.f32 %v359, %v563
  %v565 = vpop.f32.mrf.mxu0
  %566 = vmatprep.mubr.f32.mxu0 %v202
  %567 = vmatmul.mubr.f32.gmra.mxu0 %v40
  %v568 = vpop.f32.mrf.mxu0
  %v569 = vadd.f32 %v364, %v568
  %v570 = vpop.f32.mrf.mxu0
  %571 = vmatprep.mubr.f32.mxu0 %v205
  %572 = vmatmul.mubr.f32.gmra.mxu0 %v44
  %v573 = vpop.f32.mrf.mxu0
  %v574 = vadd.f32 %v369, %v573
  %v575 = vpop.f32.mrf.mxu0
  %576 = vmatprep.mubr.f32.mxu0 %v208
  %577 = vmatmul.mubr.f32.gmra.mxu0 %v48
  %v578 = vpop.f32.mrf.mxu0
  %v579 = vadd.f32 %v374, %v578
  %v580 = vpop.f32.mrf.mxu0
  %581 = vmatprep.mubr.f32.mxu0 %v211
  %582 = vmatmul.mubr.f32.gmra.mxu0 %v52
  %v583 = vpop.f32.mrf.mxu0
  %v584 = vadd.f32 %v379, %v583
  %v585 = vpop.f32.mrf.mxu0
  %586 = vmatprep.mubr.f32.mxu0 %v214
  %587 = vmatmul.mubr.f32.gmra.mxu0 %v56
  %v588 = vpop.f32.mrf.mxu0
  %v589 = vadd.f32 %v384, %v588
  %v590 = vpop.f32.mrf.mxu0
  %591 = vmatprep.mubr.f32.mxu0 %v217
  %592 = vmatmul.mubr.f32.gmra.mxu0 %v60
  %v593 = vpop.f32.mrf.mxu0
  %v594 = vadd.f32 %v389, %v593
  %v595 = vpop.f32.mrf.mxu0
  %596 = vmatprep.mubr.f32.mxu0 %v220
  %597 = vmatmul.mubr.f32.gmra.mxu0 %v64
  %v598 = vpop.f32.mrf.mxu0
  %v599 = vadd.f32 %v394, %v598
  %v600 = vpop.f32.mrf.mxu0
  %601 = vmatprep.mubr.f32.mxu0 %v223
  %602 = vmatmul.mubr.f32.gmra.mxu0 %v68
  %v603 = vpop.f32.mrf.mxu0
  %v604 = vadd.f32 %v399, %v603
  %v605 = vpop.f32.mrf.mxu0
  %606 = vmatprep.mubr.f32.mxu0 %v226
  %607 = vmatmul.mubr.f32.gmra.mxu0 %v72
  %v608 = vpop.f32.mrf.mxu0
  %v609 = vadd.f32 %v404, %v608
  %v610 = vpop.f32.mrf.mxu0
  %611 = vmatprep.mubr.f32.mxu0 %v229
  %612 = vmatmul.mubr.f32.gmra.mxu0 %v76
  %v613 = vpop.f32.mrf.mxu0
  %v614 = vadd.f32 %v409, %v613
  %v615 = vpop.f32.mrf.mxu0
  %616 = vmatprep.mubr.f32.mxu0 %v232
  %617 = vmatmul.mubr.f32.gmra.mxu0 %v80
  %v618 = vpop.f32.mrf.mxu0
  %v619 = vadd.f32 %v414, %v618
  %v620 = vpop.f32.mrf.mxu0
  %621 = vmatprep.mubr.f32.mxu0 %v235
  %622 = vmatmul.mubr.f32.gmra.mxu0 %v84
  %v623 = vpop.f32.mrf.mxu0
  %v624 = vadd.f32 %v419, %v623
  %v625 = vpop.f32.mrf.mxu0
  %626 = vmatprep.mubr.f32.mxu0 %v238
  %627 = vmatmul.mubr.f32.gmra.mxu0 %v88
  %v628 = vpop.f32.mrf.mxu0
  %v629 = vadd.f32 %v424, %v628
  %v630 = vpop.f32.mrf.mxu0
  %631 = vmatprep.mubr.f32.mxu0 %v241
  %632 = vmatmul.mubr.f32.gmra.mxu0 %v92
  %v633 = vpop.f32.mrf.mxu0
  %v634 = vadd.f32 %v429, %v633
  %v635 = vpop.f32.mrf.mxu0
  %636 = vmatprep.mubr.f32.mxu0 %v244
  %637 = vmatmul.mubr.f32.gmra.mxu0 %v96
  %v638 = vpop.f32.mrf.mxu0
  %v639 = vadd.f32 %v434, %v638
  %v640 = vpop.f32.mrf.mxu0
  %641 = vmatprep.mubr.f32.mxu0 %v247
  %642 = vmatmul.mubr.f32.gmra.mxu0 %v100
  %v643 = vpop.f32.mrf.mxu0
  %v644 = vadd.f32 %v439, %v643
  %v645 = vpop.f32.mrf.mxu0
  %646 = vmatprep.mubr.f32.mxu0 %v250
  %647 = vmatmul.mubr.f32.gmra.mxu0 %v104
  %v648 = vpop.f32.mrf.mxu0
  %v649 = vadd.f32 %v444, %v648
  %v650 = vpop.f32.mrf.mxu0
  %651 = vmatprep.mubr.f32.mxu0 %v253
  %652 = vmatmul.mubr.f32.gmra.mxu0 %v108
  %v653 = vpop.f32.mrf.mxu0
  %v654 = vadd.f32 %v449, %v653
  %v655 = vpop.f32.mrf.mxu0
  %656 = vmatprep.mubr.f32.mxu0 %v256
  %657 = vmatmul.mubr.f32.gmra.mxu0 %v112
  %v658 = vpop.f32.mrf.mxu0
  %v659 = vadd.f32 %v454, %v658
  %v660 = vpop.f32.mrf.mxu0
  %661 = vmatprep.mubr.f32.mxu0 %v259
  %662 = vmatmul.mubr.f32.gmra.mxu0 %v116
  %v663 = vpop.f32.mrf.mxu0
  %v664 = vadd.f32 %v459, %v663
  %v665 = vpop.f32.mrf.mxu0
  %666 = vmatprep.mubr.f32.mxu0 %v262
  %667 = vmatmul.mubr.f32.gmra.mxu0 %v120
  %v668 = vpop.f32.mrf.mxu0
  %v669 = vadd.f32 %v464, %v668
  %v670 = vpop.f32.mrf.mxu0
  %671 = vmatprep.mubr.f32.mxu0 %v265
  %672 = vmatmul.mubr.f32.gmra.mxu0 %v124
  %v673 = vpop.f32.mrf.mxu0
  %v674 = vadd.f32 %v469, %v673
  %v675 = vpop.f32.mrf.mxu0
  %676 = vdwg.mxu0
  %v677 = vld [vmem:[%s2] sm:$0xff]
  %v678 = vld [vmem:[%s2 + $0x8] sm:$0xff]
  %v679 = vld [vmem:[%s2 + $0x10] sm:$0xff]
  %v680 = vld [vmem:[%s2 + $0x18] sm:$0xff]
  %v681 = vld [vmem:[%s2 + $0x20] sm:$0xff]
  %v682 = vld [vmem:[%s2 + $0x28] sm:$0xff]
  %v683 = vld [vmem:[%s2 + $0x30] sm:$0xff]
  %v684 = vld [vmem:[%s2 + $0x38] sm:$0xff]
  %v685 = vld [vmem:[%s2 + $0x40] sm:$0xff]
  %v686 = vld [vmem:[%s2 + $0x48] sm:$0xff]
  %v687 = vld [vmem:[%s2 + $0x50] sm:$0xff]
  %v688 = vld [vmem:[%s2 + $0x58] sm:$0xff]
  %v689 = vld [vmem:[%s2 + $0x60] sm:$0xff]
  %v690 = vld [vmem:[%s2 + $0x68] sm:$0xff]
  %v691 = vld [vmem:[%s2 + $0x70] sm:$0xff]
  %v692 = vld [vmem:[%s2 + $0x78] sm:$0xff]
  %v693 = vld [vmem:[%s2 + $0x80] sm:$0xff]
  %v694 = vld [vmem:[%s2 + $0x88] sm:$0xff]
  %v695 = vld [vmem:[%s2 + $0x90] sm:$0xff]
  %v696 = vld [vmem:[%s2 + $0x98] sm:$0xff]
  %v697 = vld [vmem:[%s2 + $0xa0] sm:$0xff]
  %v698 = vld [vmem:[%s2 + $0xa8] sm:$0xff]
  %v699 = vld [vmem:[%s2 + $0xb0] sm:$0xff]
  %v700 = vld [vmem:[%s2 + $0xb8] sm:$0xff]
  %v701 = vld [vmem:[%s2 + $0xc0] sm:$0xff]
  %v702 = vld [vmem:[%s2 + $0xc8] sm:$0xff]
  %v703 = vld [vmem:[%s2 + $0xd0] sm:$0xff]
  %v704 = vld [vmem:[%s2 + $0xd8] sm:$0xff]
  %vm705 = vcmask 916480
  %v707 = vsel %vm705, %v539, 0
  %v710 = vsel %vm705, %v544, 0
  %v713 = vsel %vm705, %v549, 0
  %v716 = vsel %vm705, %v554, 0
  %v719 = vsel %vm705, %v559, 0
  %v722 = vsel %vm705, %v564, 0
  %v725 = vsel %vm705, %v569, 0
  %v728 = vsel %vm705, %v574, 0
  %v731 = vsel %vm705, %v579, 0
  %v734 = vsel %vm705, %v584, 0
  %v737 = vsel %vm705, %v589, 0
  %v740 = vsel %vm705, %v594, 0
  %v743 = vsel %vm705, %v599, 0
  %v746 = vsel %vm705, %v604, 0
  %v749 = vsel %vm705, %v609, 0
  %v752 = vsel %vm705, %v614, 0
  %v755 = vsel %vm705, %v619, 0
  %v758 = vsel %vm705, %v624, 0
  %v761 = vsel %vm705, %v629, 0
  %v764 = vsel %vm705, %v634, 0
  %v767 = vsel %vm705, %v639, 0
  %v770 = vsel %vm705, %v644, 0
  %v773 = vsel %vm705, %v649, 0
  %v776 = vsel %vm705, %v654, 0
  %v779 = vsel %vm705, %v659, 0
  %v782 = vsel %vm705, %v664, 0
  %v785 = vsel %vm705, %v669, 0
  %v788 = vsel %vm705, %v674, 0
  %790 = vmatprep.subr.mxu0 0.0
  %791 = vmatpush1.msra.mxu0 0.0
  %792 = vmatprep.subr.mxu0 0.0
  %793 = vmatpush1.msra.mxu0 0.0
  %794 = vmatprep.subr.mxu0 %v704
  %795 = vmatpush1.msra.mxu0 %v703
  %796 = vmatprep.subr.mxu0 %v702
  %797 = vmatpush1.msra.mxu0 %v701
  %798 = vmatprep.subr.mxu0 %v700
  %799 = vmatpush1.msra.mxu0 %v699
  %800 = vmatprep.subr.mxu0 %v698
  %801 = vmatpush1.msra.mxu0 %v697
  %802 = vmatprep.subr.mxu0 %v696
  %803 = vmatpush1.msra.mxu0 %v695
  %804 = vmatprep.subr.mxu0 %v694
  %805 = vmatpush1.msra.mxu0 %v693
  %806 = vmatprep.subr.mxu0 %v692
  %807 = vmatpush1.msra.mxu0 %v691
  %808 = vmatprep.subr.mxu0 %v690
  %809 = vmatpush1.msra.mxu0 %v689
  %810 = vmatprep.subr.mxu0 %v688
  %811 = vmatpush1.msra.mxu0 %v687
  %812 = vmatprep.subr.mxu0 %v686
  %813 = vmatpush1.msra.mxu0 %v685
  %814 = vmatprep.subr.mxu0 %v684
  %815 = vmatpush1.msra.mxu0 %v683
  %816 = vmatprep.subr.mxu0 %v682
  %817 = vmatpush1.msra.mxu0 %v681
  %818 = vmatprep.subr.mxu0 %v680
  %819 = vmatpush1.msra.mxu0 %v679
  %820 = vmatprep.subr.mxu0 %v678
  %821 = vmatpush1.msra.mxu0 %v677
  %822 = vmatprep.subr.mxu0 0.0
  %823 = vmatpush2.msra.mxu0 0.0
  %824 = vmatprep.subr.mxu0 0.0
  %825 = vmatpush2.msra.mxu0 0.0
  %826 = vmatprep.subr.mxu0 0.0
  %827 = vmatpush2.msra.mxu0 0.0
  %828 = vmatprep.subr.mxu0 0.0
  %829 = vmatpush2.msra.mxu0 0.0
  %830 = vmatprep.subr.mxu0 0.0
  %831 = vmatpush2.msra.mxu0 0.0
  %832 = vmatprep.subr.mxu0 0.0
  %833 = vmatpush2.msra.mxu0 0.0
  %834 = vmatprep.subr.mxu0 0.0
  %835 = vmatpush2.msra.mxu0 0.0
  %836 = vmatprep.subr.mxu0 0.0
  %837 = vmatpush2.msra.mxu0 0.0
  %838 = vmatprep.subr.mxu0 0.0
  %839 = vmatpush2.msra.mxu0 0.0
  %840 = vmatprep.subr.mxu0 0.0
  %841 = vmatpush2.msra.mxu0 0.0
  %842 = vmatprep.subr.mxu0 0.0
  %843 = vmatpush2.msra.mxu0 0.0
  %844 = vmatprep.subr.mxu0 0.0
  %845 = vmatpush2.msra.mxu0 0.0
  %846 = vmatprep.subr.mxu0 0.0
  %847 = vmatpush2.msra.mxu0 0.0
  %848 = vmatprep.subr.mxu0 0.0
  %849 = vmatpush2.msra.mxu0 0.0
  %850 = vmatprep.subr.mxu0 0.0
  %851 = vmatpush2.msra.mxu0 0.0
  %852 = vmatprep.subr.mxu0 0.0
  %853 = vmatpush2.msra.mxu0 0.0
  %854 = vmatprep.mubr.f32.mxu0 0.0
  %855 = vmatmul.mubr.f32.gmra.mxu0 %v707
  %v856 = vpop.f32.mrf.mxu0
  %v857 = vadd.f32 0.0, %v856
  %v858 = vpop.f32.mrf.mxu0
  %v859 = vadd.f32 0.0, %v858
  %860 = vmatprep.mubr.f32.mxu0 0.0
  %861 = vmatmul.mubr.f32.gmra.mxu0 %v710
  %v862 = vpop.f32.mrf.mxu0
  %v863 = vadd.f32 0.0, %v862
  %v864 = vpop.f32.mrf.mxu0
  %v865 = vadd.f32 0.0, %v864
  %866 = vmatprep.mubr.f32.mxu0 0.0
  %867 = vmatmul.mubr.f32.gmra.mxu0 %v713
  %v868 = vpop.f32.mrf.mxu0
  %v869 = vadd.f32 0.0, %v868
  %v870 = vpop.f32.mrf.mxu0
  %v871 = vadd.f32 0.0, %v870
  %872 = vmatprep.mubr.f32.mxu0 0.0
  %873 = vmatmul.mubr.f32.gmra.mxu0 %v716
  %v874 = vpop.f32.mrf.mxu0
  %v875 = vadd.f32 0.0, %v874
  %v876 = vpop.f32.mrf.mxu0
  %v877 = vadd.f32 0.0, %v876
  %878 = vmatprep.mubr.f32.mxu0 0.0
  %879 = vmatmul.mubr.f32.gmra.mxu0 %v719
  %v880 = vpop.f32.mrf.mxu0
  %v881 = vadd.f32 0.0, %v880
  %v882 = vpop.f32.mrf.mxu0
  %v883 = vadd.f32 0.0, %v882
  %884 = vmatprep.mubr.f32.mxu0 0.0
  %885 = vmatmul.mubr.f32.gmra.mxu0 %v722
  %v886 = vpop.f32.mrf.mxu0
  %v887 = vadd.f32 0.0, %v886
  %v888 = vpop.f32.mrf.mxu0
  %v889 = vadd.f32 0.0, %v888
  %890 = vmatprep.mubr.f32.mxu0 0.0
  %891 = vmatmul.mubr.f32.gmra.mxu0 %v725
  %v892 = vpop.f32.mrf.mxu0
  %v893 = vadd.f32 0.0, %v892
  %v894 = vpop.f32.mrf.mxu0
  %v895 = vadd.f32 0.0, %v894
  %896 = vmatprep.mubr.f32.mxu0 0.0
  %897 = vmatmul.mubr.f32.gmra.mxu0 %v728
  %v898 = vpop.f32.mrf.mxu0
  %v899 = vadd.f32 0.0, %v898
  %v900 = vpop.f32.mrf.mxu0
  %v901 = vadd.f32 0.0, %v900
  %902 = vmatprep.mubr.f32.mxu0 0.0
  %903 = vmatmul.mubr.f32.gmra.mxu0 %v731
  %v904 = vpop.f32.mrf.mxu0
  %v905 = vadd.f32 0.0, %v904
  %v906 = vpop.f32.mrf.mxu0
  %v907 = vadd.f32 0.0, %v906
  %908 = vmatprep.mubr.f32.mxu0 0.0
  %909 = vmatmul.mubr.f32.gmra.mxu0 %v734
  %v910 = vpop.f32.mrf.mxu0
  %v911 = vadd.f32 0.0, %v910
  %v912 = vpop.f32.mrf.mxu0
  %v913 = vadd.f32 0.0, %v912
  %914 = vmatprep.mubr.f32.mxu0 0.0
  %915 = vmatmul.mubr.f32.gmra.mxu0 %v737
  %v916 = vpop.f32.mrf.mxu0
  %v917 = vadd.f32 0.0, %v916
  %v918 = vpop.f32.mrf.mxu0
  %v919 = vadd.f32 0.0, %v918
  %920 = vmatprep.mubr.f32.mxu0 0.0
  %921 = vmatmul.mubr.f32.gmra.mxu0 %v740
  %v922 = vpop.f32.mrf.mxu0
  %v923 = vadd.f32 0.0, %v922
  %v924 = vpop.f32.mrf.mxu0
  %v925 = vadd.f32 0.0, %v924
  %926 = vmatprep.mubr.f32.mxu0 0.0
  %927 = vmatmul.mubr.f32.gmra.mxu0 %v743
  %v928 = vpop.f32.mrf.mxu0
  %v929 = vadd.f32 0.0, %v928
  %v930 = vpop.f32.mrf.mxu0
  %v931 = vadd.f32 0.0, %v930
  %932 = vmatprep.mubr.f32.mxu0 0.0
  %933 = vmatmul.mubr.f32.gmra.mxu0 %v746
  %v934 = vpop.f32.mrf.mxu0
  %v935 = vadd.f32 0.0, %v934
  %v936 = vpop.f32.mrf.mxu0
  %v937 = vadd.f32 0.0, %v936
  %938 = vmatprep.mubr.f32.mxu0 0.0
  %939 = vmatmul.mubr.f32.gmra.mxu0 %v749
  %v940 = vpop.f32.mrf.mxu0
  %v941 = vadd.f32 0.0, %v940
  %v942 = vpop.f32.mrf.mxu0
  %v943 = vadd.f32 0.0, %v942
  %944 = vmatprep.mubr.f32.mxu0 0.0
  %945 = vmatmul.mubr.f32.gmra.mxu0 %v752
  %v946 = vpop.f32.mrf.mxu0
  %v947 = vadd.f32 0.0, %v946
  %v948 = vpop.f32.mrf.mxu0
  %v949 = vadd.f32 0.0, %v948
  %950 = vmatprep.mubr.f32.mxu0 0.0
  %951 = vmatmul.mubr.f32.gmra.mxu0 %v755
  %v952 = vpop.f32.mrf.mxu0
  %v953 = vadd.f32 0.0, %v952
  %v954 = vpop.f32.mrf.mxu0
  %v955 = vadd.f32 0.0, %v954
  %956 = vmatprep.mubr.f32.mxu0 0.0
  %957 = vmatmul.mubr.f32.gmra.mxu0 %v758
  %v958 = vpop.f32.mrf.mxu0
  %v959 = vadd.f32 0.0, %v958
  %v960 = vpop.f32.mrf.mxu0
  %v961 = vadd.f32 0.0, %v960
  %962 = vmatprep.mubr.f32.mxu0 0.0
  %963 = vmatmul.mubr.f32.gmra.mxu0 %v761
  %v964 = vpop.f32.mrf.mxu0
  %v965 = vadd.f32 0.0, %v964
  %v966 = vpop.f32.mrf.mxu0
  %v967 = vadd.f32 0.0, %v966
  %968 = vmatprep.mubr.f32.mxu0 0.0
  %969 = vmatmul.mubr.f32.gmra.mxu0 %v764
  %v970 = vpop.f32.mrf.mxu0
  %v971 = vadd.f32 0.0, %v970
  %v972 = vpop.f32.mrf.mxu0
  %v973 = vadd.f32 0.0, %v972
  %974 = vmatprep.mubr.f32.mxu0 0.0
  %975 = vmatmul.mubr.f32.gmra.mxu0 %v767
  %v976 = vpop.f32.mrf.mxu0
  %v977 = vadd.f32 0.0, %v976
  %v978 = vpop.f32.mrf.mxu0
  %v979 = vadd.f32 0.0, %v978
  %980 = vmatprep.mubr.f32.mxu0 0.0
  %981 = vmatmul.mubr.f32.gmra.mxu0 %v770
  %v982 = vpop.f32.mrf.mxu0
  %v983 = vadd.f32 0.0, %v982
  %v984 = vpop.f32.mrf.mxu0
  %v985 = vadd.f32 0.0, %v984
  %986 = vmatprep.mubr.f32.mxu0 0.0
  %987 = vmatmul.mubr.f32.gmra.mxu0 %v773
  %v988 = vpop.f32.mrf.mxu0
  %v989 = vadd.f32 0.0, %v988
  %v990 = vpop.f32.mrf.mxu0
  %v991 = vadd.f32 0.0, %v990
  %992 = vmatprep.mubr.f32.mxu0 0.0
  %993 = vmatmul.mubr.f32.gmra.mxu0 %v776
  %v994 = vpop.f32.mrf.mxu0
  %v995 = vadd.f32 0.0, %v994
  %v996 = vpop.f32.mrf.mxu0
  %v997 = vadd.f32 0.0, %v996
  %998 = vmatprep.mubr.f32.mxu0 0.0
  %999 = vmatmul.mubr.f32.gmra.mxu0 %v779
  %v1000 = vpop.f32.mrf.mxu0
  %v1001 = vadd.f32 0.0, %v1000
  %v1002 = vpop.f32.mrf.mxu0
  %v1003 = vadd.f32 0.0, %v1002
  %1004 = vmatprep.mubr.f32.mxu0 0.0
  %1005 = vmatmul.mubr.f32.gmra.mxu0 %v782
  %v1006 = vpop.f32.mrf.mxu0
  %v1007 = vadd.f32 0.0, %v1006
  %v1008 = vpop.f32.mrf.mxu0
  %v1009 = vadd.f32 0.0, %v1008
  %1010 = vmatprep.mubr.f32.mxu0 0.0
  %1011 = vmatmul.mubr.f32.gmra.mxu0 %v785
  %v1012 = vpop.f32.mrf.mxu0
  %v1013 = vadd.f32 0.0, %v1012
  %v1014 = vpop.f32.mrf.mxu0
  %v1015 = vadd.f32 0.0, %v1014
  %1016 = vmatprep.mubr.f32.mxu0 0.0
  %1017 = vmatmul.mubr.f32.gmra.mxu0 %v788
  %v1018 = vpop.f32.mrf.mxu0
  %v1019 = vadd.f32 0.0, %v1018
  %v1020 = vpop.f32.mrf.mxu0
  %v1021 = vadd.f32 0.0, %v1020
  %1022 = vdwg.mxu0
  %1023 = vst [vmem:[%s3] sm:$0xff] %v857
  %vm1024 = vcmask 785408
  %1025 = vst.msk [vmem:[%s3 + $0x8] sm:$0xff] %vm1024, %v859
  %1026 = vst [vmem:[%s3 + $0x10] sm:$0xff] %v863
  %1027 = vst.msk [vmem:[%s3 + $0x18] sm:$0xff] %vm1024, %v865
  %1028 = vst [vmem:[%s3 + $0x20] sm:$0xff] %v869
  %1029 = vst.msk [vmem:[%s3 + $0x28] sm:$0xff] %vm1024, %v871
  %1030 = vst [vmem:[%s3 + $0x30] sm:$0xff] %v875
  %1031 = vst.msk [vmem:[%s3 + $0x38] sm:$0xff] %vm1024, %v877
  %1032 = vst [vmem:[%s3 + $0x40] sm:$0xff] %v881
  %1033 = vst.msk [vmem:[%s3 + $0x48] sm:$0xff] %vm1024, %v883
  %1034 = vst [vmem:[%s3 + $0x50] sm:$0xff] %v887
  %1035 = vst.msk [vmem:[%s3 + $0x58] sm:$0xff] %vm1024, %v889
  %1036 = vst [vmem:[%s3 + $0x60] sm:$0xff] %v893
  %1037 = vst.msk [vmem:[%s3 + $0x68] sm:$0xff] %vm1024, %v895
  %1038 = vst [vmem:[%s3 + $0x70] sm:$0xff] %v899
  %1039 = vst.msk [vmem:[%s3 + $0x78] sm:$0xff] %vm1024, %v901
  %1040 = vst [vmem:[%s3 + $0x80] sm:$0xff] %v905
  %1041 = vst.msk [vmem:[%s3 + $0x88] sm:$0xff] %vm1024, %v907
  %1042 = vst [vmem:[%s3 + $0x90] sm:$0xff] %v911
  %1043 = vst.msk [vmem:[%s3 + $0x98] sm:$0xff] %vm1024, %v913
  %1044 = vst [vmem:[%s3 + $0xa0] sm:$0xff] %v917
  %1045 = vst.msk [vmem:[%s3 + $0xa8] sm:$0xff] %vm1024, %v919
  %1046 = vst [vmem:[%s3 + $0xb0] sm:$0xff] %v923
  %1047 = vst.msk [vmem:[%s3 + $0xb8] sm:$0xff] %vm1024, %v925
  %1048 = vst [vmem:[%s3 + $0xc0] sm:$0xff] %v929
  %1049 = vst.msk [vmem:[%s3 + $0xc8] sm:$0xff] %vm1024, %v931
  %1050 = vst [vmem:[%s3 + $0xd0] sm:$0xff] %v935
  %1051 = vst.msk [vmem:[%s3 + $0xd8] sm:$0xff] %vm1024, %v937
  %1052 = vst [vmem:[%s3 + $0xe0] sm:$0xff] %v941
  %1053 = vst.msk [vmem:[%s3 + $0xe8] sm:$0xff] %vm1024, %v943
  %1054 = vst [vmem:[%s3 + $0xf0] sm:$0xff] %v947
  %1055 = vst.msk [vmem:[%s3 + $0xf8] sm:$0xff] %vm1024, %v949
  %1056 = vst [vmem:[%s3 + $0x100] sm:$0xff] %v953
  %1057 = vst.msk [vmem:[%s3 + $0x108] sm:$0xff] %vm1024, %v955
  %1058 = vst [vmem:[%s3 + $0x110] sm:$0xff] %v959
  %1059 = vst.msk [vmem:[%s3 + $0x118] sm:$0xff] %vm1024, %v961
  %1060 = vst [vmem:[%s3 + $0x120] sm:$0xff] %v965
  %1061 = vst.msk [vmem:[%s3 + $0x128] sm:$0xff] %vm1024, %v967
  %1062 = vst [vmem:[%s3 + $0x130] sm:$0xff] %v971
  %1063 = vst.msk [vmem:[%s3 + $0x138] sm:$0xff] %vm1024, %v973
  %1064 = vst [vmem:[%s3 + $0x140] sm:$0xff] %v977
  %1065 = vst.msk [vmem:[%s3 + $0x148] sm:$0xff] %vm1024, %v979
  %1066 = vst [vmem:[%s3 + $0x150] sm:$0xff] %v983
  %1067 = vst.msk [vmem:[%s3 + $0x158] sm:$0xff] %vm1024, %v985
  %1068 = vst [vmem:[%s3 + $0x160] sm:$0xff] %v989
  %1069 = vst.msk [vmem:[%s3 + $0x168] sm:$0xff] %vm1024, %v991
  %1070 = vst [vmem:[%s3 + $0x170] sm:$0xff] %v995
  %1071 = vst.msk [vmem:[%s3 + $0x178] sm:$0xff] %vm1024, %v997
  %1072 = vst [vmem:[%s3 + $0x180] sm:$0xff] %v1001
  %1073 = vst.msk [vmem:[%s3 + $0x188] sm:$0xff] %vm1024, %v1003
  %1074 = vst [vmem:[%s3 + $0x190] sm:$0xff] %v1007
  %1075 = vst.msk [vmem:[%s3 + $0x198] sm:$0xff] %vm1024, %v1009
  %1076 = vst [vmem:[%s3 + $0x1a0] sm:$0xff] %v1013
  %1077 = vst.msk [vmem:[%s3 + $0x1a8] sm:$0xff] %vm1024, %v1015
  %1078 = vst [vmem:[%s3 + $0x1b0] sm:$0xff] %v1019
  %1079 = vst.msk [vmem:[%s3 + $0x1b8] sm:$0xff] %vm1024, %v1021
  // Predicated region
  $region14: #{forward.1} parent=0 // pred_check
    _
  $region15: #{forward.1} parent=0 // pred_check_branch
    %1081 = sbr.rel (0) target = $region17
  $region16: #{forward.1} parent=0 // pred_region
    _
  $region17: #{forward.1} parent=0 // pred_fallthru
    _
  // Predicated region
  $region18: #{forward.1} parent=0 // pred_check
    _
  $region19: #{forward.1} parent=0 // pred_check_branch
    %1083 = sbr.rel (0) target = $region21
  $region20: #{forward.1} parent=0 // pred_region
    _
  $region21: #{forward.1} parent=0 // pred_fallthru
    _

</llo_original>
